<compile_context>
chip_gen: v6e
topology: v6e:2x2x1
jax: 0.10.0
libtpu: 0.0.40
codegen_flags: <defaults>
</compile_context>

<pallas_src>
import functools

import jax
import jax.numpy as jnp
from jax import lax
from jax.experimental import pallas as pl
from jax.experimental.pallas import tpu as pltpu


def _nearest_idx(out_size, in_size):
    # PyTorch F.interpolate(mode='nearest', the default): src = floor(dst * in / out).
    return [(i * in_size) // out_size for i in range(out_size)]


def _runs(idx):
    """Decompose a non-decreasing nearest-neighbor index list into contiguous source
    runs: concatenating src[s:s+l] over the returned (s, l) pairs reproduces src[idx]."""
    runs = []
    start = prev = idx[0]
    length = 1
    for v in idx[1:]:
        if v == prev + 1:
            length += 1
        else:
            runs.append((start, length))
            start = v
            length = 1
        prev = v
    runs.append((start, length))
    return runs


def _dst_runs(runs):
    """Attach destination offsets to source runs -> (src_start, dst_start, length)."""
    out, dst = [], 0
    for src, ln in runs:
        out.append((src, dst, ln))
        dst += ln
    return tuple(out)


def _gather_axis(x, runs, axis):
    """Static nearest-neighbor gather along `axis` as slice + concat (zero FLOPs)."""
    parts = [lax.slice_in_dim(x, s, s + l, axis=axis) for s, l in runs]
    return parts[0] if len(parts) == 1 else jnp.concatenate(parts, axis=axis)


def _interp_wrapper_kernel(x_ref, w_ref, b_ref, o_ref, *,
                           C, rows_dn, cols_dn, cols_up, rows_up):
    # ---- nearest downsample: static slice + concat copies, kept 2-D native ---------
    xd = []
    for c in range(C):
        plane = x_ref[0, c]                              # (H, W)  f32
        plane = _gather_axis(plane, rows_dn, axis=0)     # (H2, W)
        xd.append(_gather_axis(plane, cols_dn, axis=1))  # (H2, W2)

    # ---- inner model: 1x1 conv as unrolled VPU FMAs (w, b are SMEM scalars) --------
    for o in range(C):
        acc = xd[0] * w_ref[o * C]
        for c in range(1, C):
            acc = acc + xd[c] * w_ref[o * C + c]
        acc = acc + b_ref[o]                             # (H2, W2) f32

        # ---- nearest column upsample (lane dim): static slice + concat -------------
        zc = _gather_axis(acc, cols_up, axis=1)          # (H2, W)

        # ---- nearest row upsample folded straight into the output stores -----------
        # Duplicated output rows are repeated stores of the same source slice, so no
        # full upsampled plane is ever materialized.
        for src, dst, ln in rows_up:
            o_ref[0, o, pl.ds(dst, ln), :] = zc[src:src + ln, :]


def interpolate_wrapper_forward(x, w, b, *, step):
    N, C, H, W = x.shape
    H2 = H // step * step
    W2 = W // step * step
    assert H2 > 0 and W2 > 0, "spatial dims must be >= step (else interpolated size is 0)"

    # Static nearest-neighbor index runs, computed in Python and baked into the kernel.
    rows_dn = tuple(_runs(_nearest_idx(H2, H)))
    cols_dn = tuple(_runs(_nearest_idx(W2, W)))
    cols_up = tuple(_runs(_nearest_idx(W, W2)))
    rows_up = _dst_runs(_runs(_nearest_idx(H, H2)))

    kernel = functools.partial(
        _interp_wrapper_kernel, C=C,
        rows_dn=rows_dn, cols_dn=cols_dn, cols_up=cols_up, rows_up=rows_up)

    grid_spec = pltpu.PrefetchScalarGridSpec(
        num_scalar_prefetch=0,
        grid=(N,),
        in_specs=[
            pl.BlockSpec((1, C, H, W), lambda n: (n, 0, 0, 0)),   # x: one plane / step
            pl.BlockSpec(memory_space=pltpu.MemorySpace.SMEM),    # w flat (C*C,) scalars
            pl.BlockSpec(memory_space=pltpu.MemorySpace.SMEM),    # b (C,) scalars
        ],
        out_specs=pl.BlockSpec((1, C, H, W), lambda n: (n, 0, 0, 0)),
    )

    return pl.pallas_call(
        kernel,
        out_shape=jax.ShapeDtypeStruct((N, C, H, W), x.dtype),
        grid_spec=grid_spec,
        compiler_params=pltpu.CompilerParams(
            dimension_semantics=("parallel",)),
    )(x, w.reshape(C * C).astype(jnp.float32), b.astype(jnp.float32))


def _ref_forward(x, w, b, *, step):
    # Pure-JAX reference mirroring torch.nn.functional.interpolate(mode='nearest')
    # around a 1x1-conv "model".
    N, C, H, W = x.shape
    H2, W2 = H // step * step, W // step * step
    ih = jnp.array(_nearest_idx(H2, H))
    iw = jnp.array(_nearest_idx(W2, W))
    xd = x[:, :, ih][:, :, :, iw]
    z = jnp.einsum('oc,nchw->nohw', w, xd,
                   preferred_element_type=jnp.float32) + b[None, :, None, None]
    ih2 = jnp.array(_nearest_idx(H, H2))
    iw2 = jnp.array(_nearest_idx(W, W2))
    return z[:, :, ih2][:, :, :, iw2]


if __name__ == "__main__":
    key = jax.random.PRNGKey(0)
    kx, kw, kb = jax.random.split(key, 3)

    N, C, H, W = 2, 4, 20, 20
    STEP = 8  # interpolated size = 16x16 (largest multiple of step that fits)

    x = jax.random.normal(kx, (N, C, H, W), dtype=jnp.float32)
    w = jax.random.normal(kw, (C, C), dtype=jnp.float32) * 0.1   # inner 1x1-conv weight
    b = jax.random.normal(kb, (C,), dtype=jnp.float32) * 0.1     # inner 1x1-conv bias

    out = jax.block_until_ready(interpolate_wrapper_forward(x, w, b, step=STEP))
    ref = _ref_forward(x, w, b, step=STEP)

    assert out.shape == (N, C, H, W)
    assert out.dtype == x.dtype
    assert jnp.allclose(out, ref, atol=1e-5, rtol=1e-5), "mismatch vs reference"

    print("KERNEL_OK")
</pallas_src>

<mosaic_0001>
module attributes {stable_mosaic.version = 11 : i64} {
  func.func @_interp_wrapper_kernel(%arg0: i32, %arg1: memref<1x4x20x20xf32, #tpu.memory_space<vmem>>, %arg2: memref<16xf32, #tpu.memory_space<smem>>, %arg3: memref<4xf32, #tpu.memory_space<smem>>, %arg4: memref<1x4x20x20xf32, #tpu.memory_space<vmem>>) attributes {dimension_semantics = [#tpu.dimension_semantics<parallel>], iteration_bounds = array<i64: 2>, scalar_prefetch = 0 : i64, scratch_operands = 0 : i64, tpu.core_type = #tpu.core_type<tc>, window_params = [{transform_indices = @transform_0, window_bounds = array<i64: 1, 4, 20, 20>}, {transform_indices = @transform_1, window_bounds = array<i64: 16>}, {transform_indices = @transform_2, window_bounds = array<i64: 4>}, {transform_indices = @transform_3, window_bounds = array<i64: 1, 4, 20, 20>}]} {
    %c0 = arith.constant 0 : index
    %c0_0 = arith.constant 0 : index
    %c0_1 = arith.constant 0 : index
    %c0_2 = arith.constant 0 : index
    %0 = vector.load %arg1[%c0, %c0_0, %c0_1, %c0_2] : memref<1x4x20x20xf32, #tpu.memory_space<vmem>>, vector<1x1x20x20xf32>
    %1 = vector.shape_cast %0 : vector<1x1x20x20xf32> to vector<20x20xf32>
    %2 = vector.extract_strided_slice %1 {offsets = [0, 0], sizes = [4, 20], strides = [1, 1]} : vector<20x20xf32> to vector<4x20xf32>
    %3 = vector.extract_strided_slice %1 {offsets = [5, 0], sizes = [4, 20], strides = [1, 1]} : vector<20x20xf32> to vector<4x20xf32>
    %4 = vector.extract_strided_slice %1 {offsets = [10, 0], sizes = [4, 20], strides = [1, 1]} : vector<20x20xf32> to vector<4x20xf32>
    %5 = vector.extract_strided_slice %1 {offsets = [15, 0], sizes = [4, 20], strides = [1, 1]} : vector<20x20xf32> to vector<4x20xf32>
    %6 = tpu.concatenate %2, %3, %4, %5 in 0 : vector<4x20xf32>, vector<4x20xf32>, vector<4x20xf32>, vector<4x20xf32> -> vector<16x20xf32>
    %7 = vector.extract_strided_slice %6 {offsets = [0, 0], sizes = [16, 4], strides = [1, 1]} : vector<16x20xf32> to vector<16x4xf32>
    %8 = vector.extract_strided_slice %6 {offsets = [0, 5], sizes = [16, 4], strides = [1, 1]} : vector<16x20xf32> to vector<16x4xf32>
    %9 = vector.extract_strided_slice %6 {offsets = [0, 10], sizes = [16, 4], strides = [1, 1]} : vector<16x20xf32> to vector<16x4xf32>
    %10 = vector.extract_strided_slice %6 {offsets = [0, 15], sizes = [16, 4], strides = [1, 1]} : vector<16x20xf32> to vector<16x4xf32>
    %11 = tpu.concatenate %7, %8, %9, %10 in 1 : vector<16x4xf32>, vector<16x4xf32>, vector<16x4xf32>, vector<16x4xf32> -> vector<16x16xf32>
    %c0_3 = arith.constant 0 : index
    %c1 = arith.constant 1 : index
    %c0_4 = arith.constant 0 : index
    %c0_5 = arith.constant 0 : index
    %12 = vector.load %arg1[%c0_3, %c1, %c0_4, %c0_5] : memref<1x4x20x20xf32, #tpu.memory_space<vmem>>, vector<1x1x20x20xf32>
    %13 = vector.shape_cast %12 : vector<1x1x20x20xf32> to vector<20x20xf32>
    %14 = vector.extract_strided_slice %13 {offsets = [0, 0], sizes = [4, 20], strides = [1, 1]} : vector<20x20xf32> to vector<4x20xf32>
    %15 = vector.extract_strided_slice %13 {offsets = [5, 0], sizes = [4, 20], strides = [1, 1]} : vector<20x20xf32> to vector<4x20xf32>
    %16 = vector.extract_strided_slice %13 {offsets = [10, 0], sizes = [4, 20], strides = [1, 1]} : vector<20x20xf32> to vector<4x20xf32>
    %17 = vector.extract_strided_slice %13 {offsets = [15, 0], sizes = [4, 20], strides = [1, 1]} : vector<20x20xf32> to vector<4x20xf32>
    %18 = tpu.concatenate %14, %15, %16, %17 in 0 : vector<4x20xf32>, vector<4x20xf32>, vector<4x20xf32>, vector<4x20xf32> -> vector<16x20xf32>
    %19 = vector.extract_strided_slice %18 {offsets = [0, 0], sizes = [16, 4], strides = [1, 1]} : vector<16x20xf32> to vector<16x4xf32>
    %20 = vector.extract_strided_slice %18 {offsets = [0, 5], sizes = [16, 4], strides = [1, 1]} : vector<16x20xf32> to vector<16x4xf32>
    %21 = vector.extract_strided_slice %18 {offsets = [0, 10], sizes = [16, 4], strides = [1, 1]} : vector<16x20xf32> to vector<16x4xf32>
    %22 = vector.extract_strided_slice %18 {offsets = [0, 15], sizes = [16, 4], strides = [1, 1]} : vector<16x20xf32> to vector<16x4xf32>
    %23 = tpu.concatenate %19, %20, %21, %22 in 1 : vector<16x4xf32>, vector<16x4xf32>, vector<16x4xf32>, vector<16x4xf32> -> vector<16x16xf32>
    %c0_6 = arith.constant 0 : index
    %c2 = arith.constant 2 : index
    %c0_7 = arith.constant 0 : index
    %c0_8 = arith.constant 0 : index
    %24 = vector.load %arg1[%c0_6, %c2, %c0_7, %c0_8] : memref<1x4x20x20xf32, #tpu.memory_space<vmem>>, vector<1x1x20x20xf32>
    %25 = vector.shape_cast %24 : vector<1x1x20x20xf32> to vector<20x20xf32>
    %26 = vector.extract_strided_slice %25 {offsets = [0, 0], sizes = [4, 20], strides = [1, 1]} : vector<20x20xf32> to vector<4x20xf32>
    %27 = vector.extract_strided_slice %25 {offsets = [5, 0], sizes = [4, 20], strides = [1, 1]} : vector<20x20xf32> to vector<4x20xf32>
    %28 = vector.extract_strided_slice %25 {offsets = [10, 0], sizes = [4, 20], strides = [1, 1]} : vector<20x20xf32> to vector<4x20xf32>
    %29 = vector.extract_strided_slice %25 {offsets = [15, 0], sizes = [4, 20], strides = [1, 1]} : vector<20x20xf32> to vector<4x20xf32>
    %30 = tpu.concatenate %26, %27, %28, %29 in 0 : vector<4x20xf32>, vector<4x20xf32>, vector<4x20xf32>, vector<4x20xf32> -> vector<16x20xf32>
    %31 = vector.extract_strided_slice %30 {offsets = [0, 0], sizes = [16, 4], strides = [1, 1]} : vector<16x20xf32> to vector<16x4xf32>
    %32 = vector.extract_strided_slice %30 {offsets = [0, 5], sizes = [16, 4], strides = [1, 1]} : vector<16x20xf32> to vector<16x4xf32>
    %33 = vector.extract_strided_slice %30 {offsets = [0, 10], sizes = [16, 4], strides = [1, 1]} : vector<16x20xf32> to vector<16x4xf32>
    %34 = vector.extract_strided_slice %30 {offsets = [0, 15], sizes = [16, 4], strides = [1, 1]} : vector<16x20xf32> to vector<16x4xf32>
    %35 = tpu.concatenate %31, %32, %33, %34 in 1 : vector<16x4xf32>, vector<16x4xf32>, vector<16x4xf32>, vector<16x4xf32> -> vector<16x16xf32>
    %c0_9 = arith.constant 0 : index
    %c3 = arith.constant 3 : index
    %c0_10 = arith.constant 0 : index
    %c0_11 = arith.constant 0 : index
    %36 = vector.load %arg1[%c0_9, %c3, %c0_10, %c0_11] : memref<1x4x20x20xf32, #tpu.memory_space<vmem>>, vector<1x1x20x20xf32>
    %37 = vector.shape_cast %36 : vector<1x1x20x20xf32> to vector<20x20xf32>
    %38 = vector.extract_strided_slice %37 {offsets = [0, 0], sizes = [4, 20], strides = [1, 1]} : vector<20x20xf32> to vector<4x20xf32>
    %39 = vector.extract_strided_slice %37 {offsets = [5, 0], sizes = [4, 20], strides = [1, 1]} : vector<20x20xf32> to vector<4x20xf32>
    %40 = vector.extract_strided_slice %37 {offsets = [10, 0], sizes = [4, 20], strides = [1, 1]} : vector<20x20xf32> to vector<4x20xf32>
    %41 = vector.extract_strided_slice %37 {offsets = [15, 0], sizes = [4, 20], strides = [1, 1]} : vector<20x20xf32> to vector<4x20xf32>
    %42 = tpu.concatenate %38, %39, %40, %41 in 0 : vector<4x20xf32>, vector<4x20xf32>, vector<4x20xf32>, vector<4x20xf32> -> vector<16x20xf32>
    %43 = vector.extract_strided_slice %42 {offsets = [0, 0], sizes = [16, 4], strides = [1, 1]} : vector<16x20xf32> to vector<16x4xf32>
    %44 = vector.extract_strided_slice %42 {offsets = [0, 5], sizes = [16, 4], strides = [1, 1]} : vector<16x20xf32> to vector<16x4xf32>
    %45 = vector.extract_strided_slice %42 {offsets = [0, 10], sizes = [16, 4], strides = [1, 1]} : vector<16x20xf32> to vector<16x4xf32>
    %46 = vector.extract_strided_slice %42 {offsets = [0, 15], sizes = [16, 4], strides = [1, 1]} : vector<16x20xf32> to vector<16x4xf32>
    %47 = tpu.concatenate %43, %44, %45, %46 in 1 : vector<16x4xf32>, vector<16x4xf32>, vector<16x4xf32>, vector<16x4xf32> -> vector<16x16xf32>
    %c0_12 = arith.constant 0 : index
    %48 = memref.load %arg2[%c0_12] : memref<16xf32, #tpu.memory_space<smem>>
    %49 = vector.broadcast %48 : f32 to vector<16x16xf32>
    %50 = arith.mulf %11, %49 : vector<16x16xf32>
    %c1_13 = arith.constant 1 : index
    %51 = memref.load %arg2[%c1_13] : memref<16xf32, #tpu.memory_space<smem>>
    %52 = vector.broadcast %51 : f32 to vector<16x16xf32>
    %53 = arith.mulf %23, %52 : vector<16x16xf32>
    %54 = arith.addf %50, %53 : vector<16x16xf32>
    %c2_14 = arith.constant 2 : index
    %55 = memref.load %arg2[%c2_14] : memref<16xf32, #tpu.memory_space<smem>>
    %56 = vector.broadcast %55 : f32 to vector<16x16xf32>
    %57 = arith.mulf %35, %56 : vector<16x16xf32>
    %58 = arith.addf %54, %57 : vector<16x16xf32>
    %c3_15 = arith.constant 3 : index
    %59 = memref.load %arg2[%c3_15] : memref<16xf32, #tpu.memory_space<smem>>
    %60 = vector.broadcast %59 : f32 to vector<16x16xf32>
    %61 = arith.mulf %47, %60 : vector<16x16xf32>
    %62 = arith.addf %58, %61 : vector<16x16xf32>
    %c0_16 = arith.constant 0 : index
    %63 = memref.load %arg3[%c0_16] : memref<4xf32, #tpu.memory_space<smem>>
    %64 = vector.broadcast %63 : f32 to vector<16x16xf32>
    %65 = arith.addf %62, %64 : vector<16x16xf32>
    %66 = vector.extract_strided_slice %65 {offsets = [0, 0], sizes = [16, 1], strides = [1, 1]} : vector<16x16xf32> to vector<16x1xf32>
    %67 = vector.extract_strided_slice %65 {offsets = [0, 0], sizes = [16, 5], strides = [1, 1]} : vector<16x16xf32> to vector<16x5xf32>
    %68 = vector.extract_strided_slice %65 {offsets = [0, 4], sizes = [16, 5], strides = [1, 1]} : vector<16x16xf32> to vector<16x5xf32>
    %69 = vector.extract_strided_slice %65 {offsets = [0, 8], sizes = [16, 5], strides = [1, 1]} : vector<16x16xf32> to vector<16x5xf32>
    %70 = vector.extract_strided_slice %65 {offsets = [0, 12], sizes = [16, 4], strides = [1, 1]} : vector<16x16xf32> to vector<16x4xf32>
    %71 = tpu.concatenate %66, %67, %68, %69, %70 in 1 : vector<16x1xf32>, vector<16x5xf32>, vector<16x5xf32>, vector<16x5xf32>, vector<16x4xf32> -> vector<16x20xf32>
    %72 = vector.extract_strided_slice %71 {offsets = [0, 0], sizes = [1, 20], strides = [1, 1]} : vector<16x20xf32> to vector<1x20xf32>
    %c0_17 = arith.constant 0 : index
    %c0_18 = arith.constant 0 : index
    %c0_19 = arith.constant 0 : index
    %c0_20 = arith.constant 0 : index
    %73 = vector.load %arg4[%c0_17, %c0_18, %c0_19, %c0_20] : memref<1x4x20x20xf32, #tpu.memory_space<vmem>>, vector<1x1x1x20xf32>
    %74 = vector.shape_cast %73 : vector<1x1x1x20xf32> to vector<1x20xf32>
    %75 = vector.shape_cast %72 : vector<1x20xf32> to vector<1x1x1x20xf32>
    tpu.vector_store %arg4[%c0_17, %c0_18, %c0_19, %c0_20], %75 {strides = array<i32>} : memref<1x4x20x20xf32, #tpu.memory_space<vmem>>, vector<1x1x1x20xf32>,
    %76 = vector.extract_strided_slice %71 {offsets = [0, 0], sizes = [5, 20], strides = [1, 1]} : vector<16x20xf32> to vector<5x20xf32>
    %c0_21 = arith.constant 0 : index
    %c0_22 = arith.constant 0 : index
    %c1_23 = arith.constant 1 : index
    %c0_24 = arith.constant 0 : index
    %77 = vector.load %arg4[%c0_21, %c0_22, %c1_23, %c0_24] : memref<1x4x20x20xf32, #tpu.memory_space<vmem>>, vector<1x1x5x20xf32>
    %78 = vector.shape_cast %77 : vector<1x1x5x20xf32> to vector<5x20xf32>
    %79 = vector.shape_cast %76 : vector<5x20xf32> to vector<1x1x5x20xf32>
    tpu.vector_store %arg4[%c0_21, %c0_22, %c1_23, %c0_24], %79 {strides = array<i32>} : memref<1x4x20x20xf32, #tpu.memory_space<vmem>>, vector<1x1x5x20xf32>,
    %80 = vector.extract_strided_slice %71 {offsets = [4, 0], sizes = [5, 20], strides = [1, 1]} : vector<16x20xf32> to vector<5x20xf32>
    %c0_25 = arith.constant 0 : index
    %c0_26 = arith.constant 0 : index
    %c6 = arith.constant 6 : index
    %c0_27 = arith.constant 0 : index
    %81 = vector.load %arg4[%c0_25, %c0_26, %c6, %c0_27] : memref<1x4x20x20xf32, #tpu.memory_space<vmem>>, vector<1x1x5x20xf32>
    %82 = vector.shape_cast %81 : vector<1x1x5x20xf32> to vector<5x20xf32>
    %83 = vector.shape_cast %80 : vector<5x20xf32> to vector<1x1x5x20xf32>
    tpu.vector_store %arg4[%c0_25, %c0_26, %c6, %c0_27], %83 {strides = array<i32>} : memref<1x4x20x20xf32, #tpu.memory_space<vmem>>, vector<1x1x5x20xf32>,
    %84 = vector.extract_strided_slice %71 {offsets = [8, 0], sizes = [5, 20], strides = [1, 1]} : vector<16x20xf32> to vector<5x20xf32>
    %c0_28 = arith.constant 0 : index
    %c0_29 = arith.constant 0 : index
    %c11 = arith.constant 11 : index
    %c0_30 = arith.constant 0 : index
    %85 = vector.load %arg4[%c0_28, %c0_29, %c11, %c0_30] : memref<1x4x20x20xf32, #tpu.memory_space<vmem>>, vector<1x1x5x20xf32>
    %86 = vector.shape_cast %85 : vector<1x1x5x20xf32> to vector<5x20xf32>
    %87 = vector.shape_cast %84 : vector<5x20xf32> to vector<1x1x5x20xf32>
    tpu.vector_store %arg4[%c0_28, %c0_29, %c11, %c0_30], %87 {strides = array<i32>} : memref<1x4x20x20xf32, #tpu.memory_space<vmem>>, vector<1x1x5x20xf32>,
    %88 = vector.extract_strided_slice %71 {offsets = [12, 0], sizes = [4, 20], strides = [1, 1]} : vector<16x20xf32> to vector<4x20xf32>
    %c0_31 = arith.constant 0 : index
    %c0_32 = arith.constant 0 : index
    %c16 = arith.constant 16 : index
    %c0_33 = arith.constant 0 : index
    %89 = vector.load %arg4[%c0_31, %c0_32, %c16, %c0_33] : memref<1x4x20x20xf32, #tpu.memory_space<vmem>>, vector<1x1x4x20xf32>
    %90 = vector.shape_cast %89 : vector<1x1x4x20xf32> to vector<4x20xf32>
    %91 = vector.shape_cast %88 : vector<4x20xf32> to vector<1x1x4x20xf32>
    tpu.vector_store %arg4[%c0_31, %c0_32, %c16, %c0_33], %91 {strides = array<i32>} : memref<1x4x20x20xf32, #tpu.memory_space<vmem>>, vector<1x1x4x20xf32>,
    %c4 = arith.constant 4 : index
    %92 = memref.load %arg2[%c4] : memref<16xf32, #tpu.memory_space<smem>>
    %93 = vector.broadcast %92 : f32 to vector<16x16xf32>
    %94 = arith.mulf %11, %93 : vector<16x16xf32>
    %c5 = arith.constant 5 : index
    %95 = memref.load %arg2[%c5] : memref<16xf32, #tpu.memory_space<smem>>
    %96 = vector.broadcast %95 : f32 to vector<16x16xf32>
    %97 = arith.mulf %23, %96 : vector<16x16xf32>
    %98 = arith.addf %94, %97 : vector<16x16xf32>
    %c6_34 = arith.constant 6 : index
    %99 = memref.load %arg2[%c6_34] : memref<16xf32, #tpu.memory_space<smem>>
    %100 = vector.broadcast %99 : f32 to vector<16x16xf32>
    %101 = arith.mulf %35, %100 : vector<16x16xf32>
    %102 = arith.addf %98, %101 : vector<16x16xf32>
    %c7 = arith.constant 7 : index
    %103 = memref.load %arg2[%c7] : memref<16xf32, #tpu.memory_space<smem>>
    %104 = vector.broadcast %103 : f32 to vector<16x16xf32>
    %105 = arith.mulf %47, %104 : vector<16x16xf32>
    %106 = arith.addf %102, %105 : vector<16x16xf32>
    %c1_35 = arith.constant 1 : index
    %107 = memref.load %arg3[%c1_35] : memref<4xf32, #tpu.memory_space<smem>>
    %108 = vector.broadcast %107 : f32 to vector<16x16xf32>
    %109 = arith.addf %106, %108 : vector<16x16xf32>
    %110 = vector.extract_strided_slice %109 {offsets = [0, 0], sizes = [16, 1], strides = [1, 1]} : vector<16x16xf32> to vector<16x1xf32>
    %111 = vector.extract_strided_slice %109 {offsets = [0, 0], sizes = [16, 5], strides = [1, 1]} : vector<16x16xf32> to vector<16x5xf32>
    %112 = vector.extract_strided_slice %109 {offsets = [0, 4], sizes = [16, 5], strides = [1, 1]} : vector<16x16xf32> to vector<16x5xf32>
    %113 = vector.extract_strided_slice %109 {offsets = [0, 8], sizes = [16, 5], strides = [1, 1]} : vector<16x16xf32> to vector<16x5xf32>
    %114 = vector.extract_strided_slice %109 {offsets = [0, 12], sizes = [16, 4], strides = [1, 1]} : vector<16x16xf32> to vector<16x4xf32>
    %115 = tpu.concatenate %110, %111, %112, %113, %114 in 1 : vector<16x1xf32>, vector<16x5xf32>, vector<16x5xf32>, vector<16x5xf32>, vector<16x4xf32> -> vector<16x20xf32>
    %116 = vector.extract_strided_slice %115 {offsets = [0, 0], sizes = [1, 20], strides = [1, 1]} : vector<16x20xf32> to vector<1x20xf32>
    %c0_36 = arith.constant 0 : index
    %c1_37 = arith.constant 1 : index
    %c0_38 = arith.constant 0 : index
    %c0_39 = arith.constant 0 : index
    %117 = vector.load %arg4[%c0_36, %c1_37, %c0_38, %c0_39] : memref<1x4x20x20xf32, #tpu.memory_space<vmem>>, vector<1x1x1x20xf32>
    %118 = vector.shape_cast %117 : vector<1x1x1x20xf32> to vector<1x20xf32>
    %119 = vector.shape_cast %116 : vector<1x20xf32> to vector<1x1x1x20xf32>
    tpu.vector_store %arg4[%c0_36, %c1_37, %c0_38, %c0_39], %119 {strides = array<i32>} : memref<1x4x20x20xf32, #tpu.memory_space<vmem>>, vector<1x1x1x20xf32>,
    %120 = vector.extract_strided_slice %115 {offsets = [0, 0], sizes = [5, 20], strides = [1, 1]} : vector<16x20xf32> to vector<5x20xf32>
    %c0_40 = arith.constant 0 : index
    %c1_41 = arith.constant 1 : index
    %c1_42 = arith.constant 1 : index
    %c0_43 = arith.constant 0 : index
    %121 = vector.load %arg4[%c0_40, %c1_41, %c1_42, %c0_43] : memref<1x4x20x20xf32, #tpu.memory_space<vmem>>, vector<1x1x5x20xf32>
    %122 = vector.shape_cast %121 : vector<1x1x5x20xf32> to vector<5x20xf32>
    %123 = vector.shape_cast %120 : vector<5x20xf32> to vector<1x1x5x20xf32>
    tpu.vector_store %arg4[%c0_40, %c1_41, %c1_42, %c0_43], %123 {strides = array<i32>} : memref<1x4x20x20xf32, #tpu.memory_space<vmem>>, vector<1x1x5x20xf32>,
    %124 = vector.extract_strided_slice %115 {offsets = [4, 0], sizes = [5, 20], strides = [1, 1]} : vector<16x20xf32> to vector<5x20xf32>
    %c0_44 = arith.constant 0 : index
    %c1_45 = arith.constant 1 : index
    %c6_46 = arith.constant 6 : index
    %c0_47 = arith.constant 0 : index
    %125 = vector.load %arg4[%c0_44, %c1_45, %c6_46, %c0_47] : memref<1x4x20x20xf32, #tpu.memory_space<vmem>>, vector<1x1x5x20xf32>
    %126 = vector.shape_cast %125 : vector<1x1x5x20xf32> to vector<5x20xf32>
    %127 = vector.shape_cast %124 : vector<5x20xf32> to vector<1x1x5x20xf32>
    tpu.vector_store %arg4[%c0_44, %c1_45, %c6_46, %c0_47], %127 {strides = array<i32>} : memref<1x4x20x20xf32, #tpu.memory_space<vmem>>, vector<1x1x5x20xf32>,
    %128 = vector.extract_strided_slice %115 {offsets = [8, 0], sizes = [5, 20], strides = [1, 1]} : vector<16x20xf32> to vector<5x20xf32>
    %c0_48 = arith.constant 0 : index
    %c1_49 = arith.constant 1 : index
    %c11_50 = arith.constant 11 : index
    %c0_51 = arith.constant 0 : index
    %129 = vector.load %arg4[%c0_48, %c1_49, %c11_50, %c0_51] : memref<1x4x20x20xf32, #tpu.memory_space<vmem>>, vector<1x1x5x20xf32>
    %130 = vector.shape_cast %129 : vector<1x1x5x20xf32> to vector<5x20xf32>
    %131 = vector.shape_cast %128 : vector<5x20xf32> to vector<1x1x5x20xf32>
    tpu.vector_store %arg4[%c0_48, %c1_49, %c11_50, %c0_51], %131 {strides = array<i32>} : memref<1x4x20x20xf32, #tpu.memory_space<vmem>>, vector<1x1x5x20xf32>,
    %132 = vector.extract_strided_slice %115 {offsets = [12, 0], sizes = [4, 20], strides = [1, 1]} : vector<16x20xf32> to vector<4x20xf32>
    %c0_52 = arith.constant 0 : index
    %c1_53 = arith.constant 1 : index
    %c16_54 = arith.constant 16 : index
    %c0_55 = arith.constant 0 : index
    %133 = vector.load %arg4[%c0_52, %c1_53, %c16_54, %c0_55] : memref<1x4x20x20xf32, #tpu.memory_space<vmem>>, vector<1x1x4x20xf32>
    %134 = vector.shape_cast %133 : vector<1x1x4x20xf32> to vector<4x20xf32>
    %135 = vector.shape_cast %132 : vector<4x20xf32> to vector<1x1x4x20xf32>
    tpu.vector_store %arg4[%c0_52, %c1_53, %c16_54, %c0_55], %135 {strides = array<i32>} : memref<1x4x20x20xf32, #tpu.memory_space<vmem>>, vector<1x1x4x20xf32>,
    %c8 = arith.constant 8 : index
    %136 = memref.load %arg2[%c8] : memref<16xf32, #tpu.memory_space<smem>>
    %137 = vector.broadcast %136 : f32 to vector<16x16xf32>
    %138 = arith.mulf %11, %137 : vector<16x16xf32>
    %c9 = arith.constant 9 : index
    %139 = memref.load %arg2[%c9] : memref<16xf32, #tpu.memory_space<smem>>
    %140 = vector.broadcast %139 : f32 to vector<16x16xf32>
    %141 = arith.mulf %23, %140 : vector<16x16xf32>
    %142 = arith.addf %138, %141 : vector<16x16xf32>
    %c10 = arith.constant 10 : index
    %143 = memref.load %arg2[%c10] : memref<16xf32, #tpu.memory_space<smem>>
    %144 = vector.broadcast %143 : f32 to vector<16x16xf32>
    %145 = arith.mulf %35, %144 : vector<16x16xf32>
    %146 = arith.addf %142, %145 : vector<16x16xf32>
    %c11_56 = arith.constant 11 : index
    %147 = memref.load %arg2[%c11_56] : memref<16xf32, #tpu.memory_space<smem>>
    %148 = vector.broadcast %147 : f32 to vector<16x16xf32>
    %149 = arith.mulf %47, %148 : vector<16x16xf32>
    %150 = arith.addf %146, %149 : vector<16x16xf32>
    %c2_57 = arith.constant 2 : index
    %151 = memref.load %arg3[%c2_57] : memref<4xf32, #tpu.memory_space<smem>>
    %152 = vector.broadcast %151 : f32 to vector<16x16xf32>
    %153 = arith.addf %150, %152 : vector<16x16xf32>
    %154 = vector.extract_strided_slice %153 {offsets = [0, 0], sizes = [16, 1], strides = [1, 1]} : vector<16x16xf32> to vector<16x1xf32>
    %155 = vector.extract_strided_slice %153 {offsets = [0, 0], sizes = [16, 5], strides = [1, 1]} : vector<16x16xf32> to vector<16x5xf32>
    %156 = vector.extract_strided_slice %153 {offsets = [0, 4], sizes = [16, 5], strides = [1, 1]} : vector<16x16xf32> to vector<16x5xf32>
    %157 = vector.extract_strided_slice %153 {offsets = [0, 8], sizes = [16, 5], strides = [1, 1]} : vector<16x16xf32> to vector<16x5xf32>
    %158 = vector.extract_strided_slice %153 {offsets = [0, 12], sizes = [16, 4], strides = [1, 1]} : vector<16x16xf32> to vector<16x4xf32>
    %159 = tpu.concatenate %154, %155, %156, %157, %158 in 1 : vector<16x1xf32>, vector<16x5xf32>, vector<16x5xf32>, vector<16x5xf32>, vector<16x4xf32> -> vector<16x20xf32>
    %160 = vector.extract_strided_slice %159 {offsets = [0, 0], sizes = [1, 20], strides = [1, 1]} : vector<16x20xf32> to vector<1x20xf32>
    %c0_58 = arith.constant 0 : index
    %c2_59 = arith.constant 2 : index
    %c0_60 = arith.constant 0 : index
    %c0_61 = arith.constant 0 : index
    %161 = vector.load %arg4[%c0_58, %c2_59, %c0_60, %c0_61] : memref<1x4x20x20xf32, #tpu.memory_space<vmem>>, vector<1x1x1x20xf32>
    %162 = vector.shape_cast %161 : vector<1x1x1x20xf32> to vector<1x20xf32>
    %163 = vector.shape_cast %160 : vector<1x20xf32> to vector<1x1x1x20xf32>
    tpu.vector_store %arg4[%c0_58, %c2_59, %c0_60, %c0_61], %163 {strides = array<i32>} : memref<1x4x20x20xf32, #tpu.memory_space<vmem>>, vector<1x1x1x20xf32>,
    %164 = vector.extract_strided_slice %159 {offsets = [0, 0], sizes = [5, 20], strides = [1, 1]} : vector<16x20xf32> to vector<5x20xf32>
    %c0_62 = arith.constant 0 : index
    %c2_63 = arith.constant 2 : index
    %c1_64 = arith.constant 1 : index
    %c0_65 = arith.constant 0 : index
    %165 = vector.load %arg4[%c0_62, %c2_63, %c1_64, %c0_65] : memref<1x4x20x20xf32, #tpu.memory_space<vmem>>, vector<1x1x5x20xf32>
    %166 = vector.shape_cast %165 : vector<1x1x5x20xf32> to vector<5x20xf32>
    %167 = vector.shape_cast %164 : vector<5x20xf32> to vector<1x1x5x20xf32>
    tpu.vector_store %arg4[%c0_62, %c2_63, %c1_64, %c0_65], %167 {strides = array<i32>} : memref<1x4x20x20xf32, #tpu.memory_space<vmem>>, vector<1x1x5x20xf32>,
    %168 = vector.extract_strided_slice %159 {offsets = [4, 0], sizes = [5, 20], strides = [1, 1]} : vector<16x20xf32> to vector<5x20xf32>
    %c0_66 = arith.constant 0 : index
    %c2_67 = arith.constant 2 : index
    %c6_68 = arith.constant 6 : index
    %c0_69 = arith.constant 0 : index
    %169 = vector.load %arg4[%c0_66, %c2_67, %c6_68, %c0_69] : memref<1x4x20x20xf32, #tpu.memory_space<vmem>>, vector<1x1x5x20xf32>
    %170 = vector.shape_cast %169 : vector<1x1x5x20xf32> to vector<5x20xf32>
    %171 = vector.shape_cast %168 : vector<5x20xf32> to vector<1x1x5x20xf32>
    tpu.vector_store %arg4[%c0_66, %c2_67, %c6_68, %c0_69], %171 {strides = array<i32>} : memref<1x4x20x20xf32, #tpu.memory_space<vmem>>, vector<1x1x5x20xf32>,
    %172 = vector.extract_strided_slice %159 {offsets = [8, 0], sizes = [5, 20], strides = [1, 1]} : vector<16x20xf32> to vector<5x20xf32>
    %c0_70 = arith.constant 0 : index
    %c2_71 = arith.constant 2 : index
    %c11_72 = arith.constant 11 : index
    %c0_73 = arith.constant 0 : index
    %173 = vector.load %arg4[%c0_70, %c2_71, %c11_72, %c0_73] : memref<1x4x20x20xf32, #tpu.memory_space<vmem>>, vector<1x1x5x20xf32>
    %174 = vector.shape_cast %173 : vector<1x1x5x20xf32> to vector<5x20xf32>
    %175 = vector.shape_cast %172 : vector<5x20xf32> to vector<1x1x5x20xf32>
    tpu.vector_store %arg4[%c0_70, %c2_71, %c11_72, %c0_73], %175 {strides = array<i32>} : memref<1x4x20x20xf32, #tpu.memory_space<vmem>>, vector<1x1x5x20xf32>,
    %176 = vector.extract_strided_slice %159 {offsets = [12, 0], sizes = [4, 20], strides = [1, 1]} : vector<16x20xf32> to vector<4x20xf32>
    %c0_74 = arith.constant 0 : index
    %c2_75 = arith.constant 2 : index
    %c16_76 = arith.constant 16 : index
    %c0_77 = arith.constant 0 : index
    %177 = vector.load %arg4[%c0_74, %c2_75, %c16_76, %c0_77] : memref<1x4x20x20xf32, #tpu.memory_space<vmem>>, vector<1x1x4x20xf32>
    %178 = vector.shape_cast %177 : vector<1x1x4x20xf32> to vector<4x20xf32>
    %179 = vector.shape_cast %176 : vector<4x20xf32> to vector<1x1x4x20xf32>
    tpu.vector_store %arg4[%c0_74, %c2_75, %c16_76, %c0_77], %179 {strides = array<i32>} : memref<1x4x20x20xf32, #tpu.memory_space<vmem>>, vector<1x1x4x20xf32>,
    %c12 = arith.constant 12 : index
    %180 = memref.load %arg2[%c12] : memref<16xf32, #tpu.memory_space<smem>>
    %181 = vector.broadcast %180 : f32 to vector<16x16xf32>
    %182 = arith.mulf %11, %181 : vector<16x16xf32>
    %c13 = arith.constant 13 : index
    %183 = memref.load %arg2[%c13] : memref<16xf32, #tpu.memory_space<smem>>
    %184 = vector.broadcast %183 : f32 to vector<16x16xf32>
    %185 = arith.mulf %23, %184 : vector<16x16xf32>
    %186 = arith.addf %182, %185 : vector<16x16xf32>
    %c14 = arith.constant 14 : index
    %187 = memref.load %arg2[%c14] : memref<16xf32, #tpu.memory_space<smem>>
    %188 = vector.broadcast %187 : f32 to vector<16x16xf32>
    %189 = arith.mulf %35, %188 : vector<16x16xf32>
    %190 = arith.addf %186, %189 : vector<16x16xf32>
    %c15 = arith.constant 15 : index
    %191 = memref.load %arg2[%c15] : memref<16xf32, #tpu.memory_space<smem>>
    %192 = vector.broadcast %191 : f32 to vector<16x16xf32>
    %193 = arith.mulf %47, %192 : vector<16x16xf32>
    %194 = arith.addf %190, %193 : vector<16x16xf32>
    %c3_78 = arith.constant 3 : index
    %195 = memref.load %arg3[%c3_78] : memref<4xf32, #tpu.memory_space<smem>>
    %196 = vector.broadcast %195 : f32 to vector<16x16xf32>
    %197 = arith.addf %194, %196 : vector<16x16xf32>
    %198 = vector.extract_strided_slice %197 {offsets = [0, 0], sizes = [16, 1], strides = [1, 1]} : vector<16x16xf32> to vector<16x1xf32>
    %199 = vector.extract_strided_slice %197 {offsets = [0, 0], sizes = [16, 5], strides = [1, 1]} : vector<16x16xf32> to vector<16x5xf32>
    %200 = vector.extract_strided_slice %197 {offsets = [0, 4], sizes = [16, 5], strides = [1, 1]} : vector<16x16xf32> to vector<16x5xf32>
    %201 = vector.extract_strided_slice %197 {offsets = [0, 8], sizes = [16, 5], strides = [1, 1]} : vector<16x16xf32> to vector<16x5xf32>
    %202 = vector.extract_strided_slice %197 {offsets = [0, 12], sizes = [16, 4], strides = [1, 1]} : vector<16x16xf32> to vector<16x4xf32>
    %203 = tpu.concatenate %198, %199, %200, %201, %202 in 1 : vector<16x1xf32>, vector<16x5xf32>, vector<16x5xf32>, vector<16x5xf32>, vector<16x4xf32> -> vector<16x20xf32>
    %204 = vector.extract_strided_slice %203 {offsets = [0, 0], sizes = [1, 20], strides = [1, 1]} : vector<16x20xf32> to vector<1x20xf32>
    %c0_79 = arith.constant 0 : index
    %c3_80 = arith.constant 3 : index
    %c0_81 = arith.constant 0 : index
    %c0_82 = arith.constant 0 : index
    %205 = vector.load %arg4[%c0_79, %c3_80, %c0_81, %c0_82] : memref<1x4x20x20xf32, #tpu.memory_space<vmem>>, vector<1x1x1x20xf32>
    %206 = vector.shape_cast %205 : vector<1x1x1x20xf32> to vector<1x20xf32>
    %207 = vector.shape_cast %204 : vector<1x20xf32> to vector<1x1x1x20xf32>
    tpu.vector_store %arg4[%c0_79, %c3_80, %c0_81, %c0_82], %207 {strides = array<i32>} : memref<1x4x20x20xf32, #tpu.memory_space<vmem>>, vector<1x1x1x20xf32>,
    %208 = vector.extract_strided_slice %203 {offsets = [0, 0], sizes = [5, 20], strides = [1, 1]} : vector<16x20xf32> to vector<5x20xf32>
    %c0_83 = arith.constant 0 : index
    %c3_84 = arith.constant 3 : index
    %c1_85 = arith.constant 1 : index
    %c0_86 = arith.constant 0 : index
    %209 = vector.load %arg4[%c0_83, %c3_84, %c1_85, %c0_86] : memref<1x4x20x20xf32, #tpu.memory_space<vmem>>, vector<1x1x5x20xf32>
    %210 = vector.shape_cast %209 : vector<1x1x5x20xf32> to vector<5x20xf32>
    %211 = vector.shape_cast %208 : vector<5x20xf32> to vector<1x1x5x20xf32>
    tpu.vector_store %arg4[%c0_83, %c3_84, %c1_85, %c0_86], %211 {strides = array<i32>} : memref<1x4x20x20xf32, #tpu.memory_space<vmem>>, vector<1x1x5x20xf32>,
    %212 = vector.extract_strided_slice %203 {offsets = [4, 0], sizes = [5, 20], strides = [1, 1]} : vector<16x20xf32> to vector<5x20xf32>
    %c0_87 = arith.constant 0 : index
    %c3_88 = arith.constant 3 : index
    %c6_89 = arith.constant 6 : index
    %c0_90 = arith.constant 0 : index
    %213 = vector.load %arg4[%c0_87, %c3_88, %c6_89, %c0_90] : memref<1x4x20x20xf32, #tpu.memory_space<vmem>>, vector<1x1x5x20xf32>
    %214 = vector.shape_cast %213 : vector<1x1x5x20xf32> to vector<5x20xf32>
    %215 = vector.shape_cast %212 : vector<5x20xf32> to vector<1x1x5x20xf32>
    tpu.vector_store %arg4[%c0_87, %c3_88, %c6_89, %c0_90], %215 {strides = array<i32>} : memref<1x4x20x20xf32, #tpu.memory_space<vmem>>, vector<1x1x5x20xf32>,
    %216 = vector.extract_strided_slice %203 {offsets = [8, 0], sizes = [5, 20], strides = [1, 1]} : vector<16x20xf32> to vector<5x20xf32>
    %c0_91 = arith.constant 0 : index
    %c3_92 = arith.constant 3 : index
    %c11_93 = arith.constant 11 : index
    %c0_94 = arith.constant 0 : index
    %217 = vector.load %arg4[%c0_91, %c3_92, %c11_93, %c0_94] : memref<1x4x20x20xf32, #tpu.memory_space<vmem>>, vector<1x1x5x20xf32>
    %218 = vector.shape_cast %217 : vector<1x1x5x20xf32> to vector<5x20xf32>
    %219 = vector.shape_cast %216 : vector<5x20xf32> to vector<1x1x5x20xf32>
    tpu.vector_store %arg4[%c0_91, %c3_92, %c11_93, %c0_94], %219 {strides = array<i32>} : memref<1x4x20x20xf32, #tpu.memory_space<vmem>>, vector<1x1x5x20xf32>,
    %220 = vector.extract_strided_slice %203 {offsets = [12, 0], sizes = [4, 20], strides = [1, 1]} : vector<16x20xf32> to vector<4x20xf32>
    %c0_95 = arith.constant 0 : index
    %c3_96 = arith.constant 3 : index
    %c16_97 = arith.constant 16 : index
    %c0_98 = arith.constant 0 : index
    %221 = vector.load %arg4[%c0_95, %c3_96, %c16_97, %c0_98] : memref<1x4x20x20xf32, #tpu.memory_space<vmem>>, vector<1x1x4x20xf32>
    %222 = vector.shape_cast %221 : vector<1x1x4x20xf32> to vector<4x20xf32>
    %223 = vector.shape_cast %220 : vector<4x20xf32> to vector<1x1x4x20xf32>
    tpu.vector_store %arg4[%c0_95, %c3_96, %c16_97, %c0_98], %223 {strides = array<i32>} : memref<1x4x20x20xf32, #tpu.memory_space<vmem>>, vector<1x1x4x20xf32>,
    return
  }
  func.func @transform_0(%arg0: i32) -> (i32, i32, i32, i32) {
    %c0_i32 = arith.constant 0 : i32
    %c0_i32_0 = arith.constant 0 : i32
    %c0_i32_1 = arith.constant 0 : i32
    %c0_i32_2 = arith.constant 0 : i32
    return %arg0, %c0_i32, %c0_i32_0, %c0_i32_1 : i32, i32, i32, i32
  }
  func.func @transform_1(%arg0: i32) -> i32 {
    %c0_i32 = arith.constant 0 : i32
    %c0_i32_0 = arith.constant 0 : i32
    return %c0_i32 : i32
  }
  func.func @transform_2(%arg0: i32) -> i32 {
    %c0_i32 = arith.constant 0 : i32
    %c0_i32_0 = arith.constant 0 : i32
    return %c0_i32 : i32
  }
  func.func @transform_3(%arg0: i32) -> (i32, i32, i32, i32) {
    %c0_i32 = arith.constant 0 : i32
    %c0_i32_0 = arith.constant 0 : i32
    %c0_i32_1 = arith.constant 0 : i32
    %c0_i32_2 = arith.constant 0 : i32
    return %arg0, %c0_i32, %c0_i32_0, %c0_i32_1 : i32, i32, i32, i32
  }
}

</mosaic_0001>

<llo_original>
// kernel: tpu_custom_call.1
$region0: #{tpu_custom_call.1}
  #allocation0 [shape = 'u32[]', space=smem, size = 0x4, offset = 0x4, fixed_abs, tag = 'smem constant byte address 0x4 - core index']
  #allocation1 [shape = 'u32[144,128]{1,0:T(1,128)}', space=vmem, size = 0x12000, scoped, tag = 'internal scratch']
  %s0 = inlined_call_operand.vmem [shape: f32[2,4,20,20], index: 0, kind: input, shape index: {}]
  %s1 = inlined_call_operand.vmem [shape: f32[16], index: 1, kind: input, shape index: {}]
  %s2 = inlined_call_operand.vmem [shape: f32[4], index: 2, kind: input, shape index: {}]
  %s3 = inlined_call_operand.vmem [shape: f32[2,4,20,20], index: 3, kind: output, shape index: {}]
  %s4 = sld [smem:[#allocation0]]
  $region53: #{tpu_custom_call.1} parent=0
    _
  %s6 = ssub.s32 1, %s4
  %s7 = scalar_select 0, %s6, %s4
  $region1: #{tpu_custom_call.1} parent=0
    #allocation2 [shape = 'u8[512]{0}', space=smem, size = 0x200, scoped, tag = 'input window, operand 1, single buffered']
    #allocation3 [shape = 's32[2]{0}', space=sflag, size = 0x8, scoped, tag = 'scoped memory for tpu_custom_call.1']
    #allocation4 [shape = 'u8[512]{0}', space=smem, size = 0x200, scoped, tag = 'input window, operand 2, single buffered']
    #allocation5 [shape = 's32[1]{0}', space=sflag, size = 0x4, scoped, tag = 'scoped memory for tpu_custom_call.1']
    %8 = vsyncpa [#allocation3], 0
    %9 = vsyncpa [#allocation5], 0
    loop: start=0, step=1, limit=4
    $region2: #{tpu_custom_call.1} parent=1 // loop_pre_header
      _
    $region3: #{tpu_custom_call.1} parent=1 // loop_header
      %s11 = sphi 0, %s15
      %p12 = scmp.ge.s32.totalorder %s11, 4
      %s21 = sphi 0, %s23
      %s24 = sphi 0, %s21
      %s25 = sphi 0, %s24
      %s41 = sphi 0, %s25
      %s45 = sphi 0, %s45
      %s47 = sphi 0, %s45
      %s48 = sphi 0, %s47
      %s62 = sphi 0, %s48
      %s66 = sphi 0, %s66
      %s68 = sphi 0, %s66
      %s69 = sphi 0, %s68
      %s83 = sphi 0, %s69
      %s89 = sphi 0, %s91
      %s92 = sphi 0, %s89
      %s93 = sphi 0, %s92
      %s109 = sphi 0, %s93
    $region4: #{tpu_custom_call.1} parent=1 // loop_header_branch
      %14 = sbr.rel (%p12) target = $region8
    $region5: #{tpu_custom_call.1} parent=1 // loop_body
      %s16 = ssub.s32 %s11, 1
      %s17 = ssub.s32 %s11, 2
      %s18 = sadd.s32 %s11, 1
      %s19 = ssub.s32 %s11, %s18
      %p20 = scmp.eq.s32.totalorder %s19, 0
      %s22 = sadd.s32 %s21, 1
      %s23 = scalar_select %p20, %s21, %s22
      %p26 = pneg %p20
      %p27 = scmp.eq.s32.totalorder %s11, 1
      %p28 = por %p26, %p27
      %p29 = scmp.ne.s32.totalorder %s21, %s24
      %p30 = scmp.eq.s32.totalorder %s11, 0
      %p31 = por %p29, %p30
      %p32 = scmp.ne.s32.totalorder %s21, %s24
      %p33 = scmp.eq.s32.totalorder %s16, 1
      %p34 = por %p32, %p33
      %p35 = scmp.ne.s32.totalorder %s24, %s25
      %p36 = scmp.eq.s32.totalorder %s16, 0
      %p37 = por %p35, %p36
      %p38 = scmp.ne.s32.totalorder %s24, %s25
      %p39 = scmp.eq.s32.totalorder %s17, 1
      %p40 = por %p38, %p39
      %p42 = scmp.ne.s32.totalorder %s25, %s41
      %p43 = scmp.eq.s32.totalorder %s17, 0
      %p44 = por %p42, %p43
      %s46 = sadd.s32 %s45, 1
      %p49 = scmp.eq.s32.totalorder %s11, 1
      %p50 = scmp.ne.s32.totalorder %s45, %s47
      %p51 = scmp.eq.s32.totalorder %s11, 0
      %p52 = por %p50, %p51
      %p53 = scmp.ne.s32.totalorder %s45, %s47
      %p54 = scmp.eq.s32.totalorder %s16, 1
      %p55 = por %p53, %p54
      %p56 = scmp.ne.s32.totalorder %s47, %s48
      %p57 = scmp.eq.s32.totalorder %s16, 0
      %p58 = por %p56, %p57
      %p59 = scmp.ne.s32.totalorder %s47, %s48
      %p60 = scmp.eq.s32.totalorder %s17, 1
      %p61 = por %p59, %p60
      %p63 = scmp.ne.s32.totalorder %s48, %s62
      %p64 = scmp.eq.s32.totalorder %s17, 0
      %p65 = por %p63, %p64
      %s67 = sadd.s32 %s66, 1
      %p70 = scmp.eq.s32.totalorder %s11, 1
      %p71 = scmp.ne.s32.totalorder %s66, %s68
      %p72 = scmp.eq.s32.totalorder %s11, 0
      %p73 = por %p71, %p72
      %p74 = scmp.ne.s32.totalorder %s66, %s68
      %p75 = scmp.eq.s32.totalorder %s16, 1
      %p76 = por %p74, %p75
      %p77 = scmp.ne.s32.totalorder %s68, %s69
      %p78 = scmp.eq.s32.totalorder %s16, 0
      %p79 = por %p77, %p78
      %p80 = scmp.ne.s32.totalorder %s68, %s69
      %p81 = scmp.eq.s32.totalorder %s17, 1
      %p82 = por %p80, %p81
      %p84 = scmp.ne.s32.totalorder %s69, %s83
      %p85 = scmp.eq.s32.totalorder %s17, 0
      %p86 = por %p84, %p85
      %s87 = ssub.s32 %s11, %s18
      %p88 = scmp.eq.s32.totalorder %s87, 0
      %s90 = sadd.s32 %s89, 1
      %s91 = scalar_select %p88, %s89, %s90
      %p94 = pneg %p88
      %p95 = scmp.eq.s32.totalorder %s11, 1
      %p96 = por %p94, %p95
      %p97 = scmp.ne.s32.totalorder %s89, %s92
      %p98 = scmp.eq.s32.totalorder %s11, 0
      %p99 = por %p97, %p98
      %p100 = scmp.ne.s32.totalorder %s89, %s92
      %p101 = scmp.eq.s32.totalorder %s16, 1
      %p102 = por %p100, %p101
      %p103 = scmp.ne.s32.totalorder %s92, %s93
      %p104 = scmp.eq.s32.totalorder %s16, 0
      %p105 = por %p103, %p104
      %p106 = scmp.ne.s32.totalorder %s92, %s93
      %p107 = scmp.eq.s32.totalorder %s17, 1
      %p108 = por %p106, %p107
      %p110 = scmp.ne.s32.totalorder %s93, %s109
      %p111 = scmp.eq.s32.totalorder %s17, 0
      %p112 = por %p110, %p111
      %p113 = scmp.le.s32.totalorder 1, %s11
      %p114 = scmp.lt.s32.totalorder %s11, 3
      %p115 = pnand %p113, %p114
      %p116 = pneg %p115
      // Predicated region
      $region9: #{tpu_custom_call.1} parent=5 // pred_check
        _
      $region10: #{tpu_custom_call.1} parent=5 // pred_check_branch
        %118 = sbr.rel (%p115) target = $region12
      $region11: #{tpu_custom_call.1} parent=5 // pred_region
        %s119 = ssub.s32 %s11, 1
        // Predicated region
        $region13: #{tpu_custom_call.1} parent=11 // pred_check
          %p120 = pneg %p58
        $region14: #{tpu_custom_call.1} parent=11 // pred_check_branch
          %122 = sbr.rel (%p120) target = $region16
        $region15: #{tpu_custom_call.1} parent=11 // pred_region
          %s124 = ssub.s32 16, 16
          %125 = vsyncadd [#allocation3], %s124
          %s127 = sshll.u32 %s1, 4
          %s128 = int_to_ptr.vmem [resolvable:$true] %s127
          %130 = dma.vmem_to_smem %s128, 16, [#allocation2], [#allocation3]
        $region16: #{tpu_custom_call.1} parent=11 // pred_fallthru
          _
        // Predicated region
        $region17: #{tpu_custom_call.1} parent=11 // pred_check
          %p131 = pneg %p79
        $region18: #{tpu_custom_call.1} parent=11 // pred_check_branch
          %133 = sbr.rel (%p131) target = $region20
        $region19: #{tpu_custom_call.1} parent=11 // pred_region
          %s135 = ssub.s32 16, 16
          %136 = vsyncadd [#allocation5], %s135
          %s138 = sshll.u32 %s2, 4
          %s139 = int_to_ptr.vmem [resolvable:$true] %s138
          %141 = dma.vmem_to_smem %s139, 16, [#allocation4], [#allocation5]
        $region20: #{tpu_custom_call.1} parent=11 // pred_fallthru
          _
      $region12: #{tpu_custom_call.1} parent=5 // pred_fallthru
        _
      %p142 = scmp.lt.s32.totalorder %s11, 2
      // Predicated region
      $region21: #{tpu_custom_call.1} parent=5 // pred_check
        %p143 = pneg %p142
      $region22: #{tpu_custom_call.1} parent=5 // pred_check_branch
        %145 = sbr.rel (%p143) target = $region24
      $region23: #{tpu_custom_call.1} parent=5 // pred_region
        // Predicated region
        $region25: #{tpu_custom_call.1} parent=23 // pred_check
          %p146 = pneg %p31
        $region26: #{tpu_custom_call.1} parent=23 // pred_check_branch
          %148 = sbr.rel (%p146) target = $region28
        $region27: #{tpu_custom_call.1} parent=23 // pred_region
          %p149 = scmp.lt.s32.totalorder %s11, 1
          %s150 = scalar_select %p149, %s11, 1
          %s151 = smul.addr %s150, 12
          %s152 = smul.addr %s151, 8
          %s153 = scalar_lea.vmem %s0, %s152
        $region28: #{tpu_custom_call.1} parent=23 // pred_fallthru
          _
      $region24: #{tpu_custom_call.1} parent=5 // pred_fallthru
        _
      %p154 = scmp.le.s32.totalorder 1, %s11
      %p155 = scmp.lt.s32.totalorder %s11, 3
      %p156 = pnand %p154, %p155
      %p157 = pneg %p156
      // Predicated region
      $region29: #{tpu_custom_call.1} parent=5 // pred_check
        _
      $region30: #{tpu_custom_call.1} parent=5 // pred_check_branch
        %159 = sbr.rel (%p156) target = $region32
      $region31: #{tpu_custom_call.1} parent=5 // pred_region
        %s160 = ssub.s32 %s11, 1
        // Predicated region
        $region33: #{tpu_custom_call.1} parent=31 // pred_check
          %p161 = pneg %p58
        $region34: #{tpu_custom_call.1} parent=31 // pred_check_branch
          %163 = sbr.rel (%p161) target = $region36
        $region35: #{tpu_custom_call.1} parent=31 // pred_region
          %164 = dma.done [#allocation3], 16
        $region36: #{tpu_custom_call.1} parent=31 // pred_fallthru
          _
        // Predicated region
        $region37: #{tpu_custom_call.1} parent=31 // pred_check
          %p165 = pneg %p79
        $region38: #{tpu_custom_call.1} parent=31 // pred_check_branch
          %167 = sbr.rel (%p165) target = $region40
        $region39: #{tpu_custom_call.1} parent=31 // pred_region
          %168 = dma.done [#allocation5], 16
        $region40: #{tpu_custom_call.1} parent=31 // pred_fallthru
          _
        %169 = sfence
        %p170 = scmp.lt.s32.totalorder %s16, 1
        %s171 = scalar_select %p170, %s16, 1
        %s172 = smul.addr %s171, 12
        %s173 = smul.addr %s172, 8
        %s174 = scalar_lea.vmem %s0, %s173
        %p175 = pneg %p37
        %p176 = pneg %p34
        %p177 = pneg %p58
        %p178 = pneg %p55
        %p179 = pneg %p79
        %p180 = pneg %p76
        %p181 = pneg %p105
        %p182 = pneg %p102
        %p183 = scmp.lt.s32.totalorder %s16, 1
        %s184 = scalar_select %p183, %s16, 1
        %s185 = smul.addr %s184, 12
        %s186 = smul.addr %s185, 8
        %s187 = scalar_lea.vmem %s3, %s186
        %p188 = scmp.lt.s32.totalorder %s16, 1
        %s189 = scalar_select %p188, %s16, 1
        %s190 = smul.addr %s189, 12
        %s191 = smul.addr %s190, 8
        %s192 = scalar_lea.vmem %s0, %s191
        %p193 = scmp.lt.s32.totalorder %s16, 1
        %s194 = scalar_select %p193, %s16, 1
        %s195 = smul.addr %s194, 12
        %s196 = smul.addr %s195, 8
        %s197 = scalar_lea.vmem %s3, %s196
        %v198 = vld [vmem:[%s192] sm:$0xff]
        %v199 = vld [vmem:[%s192 + $0x8] sm:$0xff]
        %v200 = vld [vmem:[%s192 + $0x10] sm:$0xf]
        %vm203 = vcmask 1046528
        %v204 = vrot.slane %v198, 1
        %v205 = vrot.slane %v199, 1
        %v206 = vsel %vm203, %v204, %v205
        %v208 = vrot.slane %v199, 2
        %vm211 = vcmask 1044480
        %v212 = vrot.slane %v199, 3
        %v213 = vrot.slane %v200, 3
        %v214 = vsel %vm211, %v212, %v213
        %vm216 = vcmask 1043456
        %v217 = vsel %vm216, %v198, %v206
        %v218 = vsel %vm216, %v208, %v214
        %221 = vrot.lane.b32.xlu0 %v217, 127
        %v222 = vpop.permute.xlu0 %221
        %223 = vrot.lane.b32.xlu0 %v218, 127
        %v224 = vpop.permute.xlu0 %223
        %227 = vrot.lane.b32.xlu0 %v217, 126
        %v228 = vpop.permute.xlu0 %227
        %229 = vrot.lane.b32.xlu0 %v218, 126
        %v230 = vpop.permute.xlu0 %229
        %233 = vrot.lane.b32.xlu0 %v217, 125
        %v234 = vpop.permute.xlu0 %233
        %235 = vrot.lane.b32.xlu0 %v218, 125
        %v236 = vpop.permute.xlu0 %235
        %vm239 = vcmask 31744
        %v240 = vsel %vm239, %v217, %v222
        %v241 = vsel %vm239, %v218, %v224
        %vm242 = vcmask 64512
        %v243 = vsel %vm242, %v240, %v228
        %v244 = vsel %vm242, %v241, %v230
        %vm245 = vcmask 97280
        %v246 = vsel %vm245, %v243, %v234
        %v247 = vsel %vm245, %v244, %v236
        %s248 = scalar_lea.vmem %s192, 24
        %v249 = vld [vmem:[%s248] sm:$0xff]
        %v250 = vld [vmem:[%s248 + $0x8] sm:$0xff]
        %v251 = vld [vmem:[%s248 + $0x10] sm:$0xf]
        %v254 = vrot.slane %v249, 1
        %v255 = vrot.slane %v250, 1
        %v256 = vsel %vm203, %v254, %v255
        %v258 = vrot.slane %v250, 2
        %v261 = vrot.slane %v250, 3
        %v262 = vrot.slane %v251, 3
        %v263 = vsel %vm211, %v261, %v262
        %v265 = vsel %vm216, %v249, %v256
        %v266 = vsel %vm216, %v258, %v263
        %269 = vrot.lane.b32.xlu0 %v265, 127
        %v270 = vpop.permute.xlu0 %269
        %271 = vrot.lane.b32.xlu0 %v266, 127
        %v272 = vpop.permute.xlu0 %271
        %275 = vrot.lane.b32.xlu0 %v265, 126
        %v276 = vpop.permute.xlu0 %275
        %277 = vrot.lane.b32.xlu0 %v266, 126
        %v278 = vpop.permute.xlu0 %277
        %281 = vrot.lane.b32.xlu0 %v265, 125
        %v282 = vpop.permute.xlu0 %281
        %283 = vrot.lane.b32.xlu0 %v266, 125
        %v284 = vpop.permute.xlu0 %283
        %v287 = vsel %vm239, %v265, %v270
        %v288 = vsel %vm239, %v266, %v272
        %v289 = vsel %vm242, %v287, %v276
        %v290 = vsel %vm242, %v288, %v278
        %v291 = vsel %vm245, %v289, %v282
        %v292 = vsel %vm245, %v290, %v284
        %s293 = scalar_lea.vmem %s192, 48
        %v294 = vld [vmem:[%s293] sm:$0xff]
        %v295 = vld [vmem:[%s293 + $0x8] sm:$0xff]
        %v296 = vld [vmem:[%s293 + $0x10] sm:$0xf]
        %v299 = vrot.slane %v294, 1
        %v300 = vrot.slane %v295, 1
        %v301 = vsel %vm203, %v299, %v300
        %v303 = vrot.slane %v295, 2
        %v306 = vrot.slane %v295, 3
        %v307 = vrot.slane %v296, 3
        %v308 = vsel %vm211, %v306, %v307
        %v310 = vsel %vm216, %v294, %v301
        %v311 = vsel %vm216, %v303, %v308
        %314 = vrot.lane.b32.xlu0 %v310, 127
        %v315 = vpop.permute.xlu0 %314
        %316 = vrot.lane.b32.xlu0 %v311, 127
        %v317 = vpop.permute.xlu0 %316
        %320 = vrot.lane.b32.xlu0 %v310, 126
        %v321 = vpop.permute.xlu0 %320
        %322 = vrot.lane.b32.xlu0 %v311, 126
        %v323 = vpop.permute.xlu0 %322
        %326 = vrot.lane.b32.xlu0 %v310, 125
        %v327 = vpop.permute.xlu0 %326
        %328 = vrot.lane.b32.xlu0 %v311, 125
        %v329 = vpop.permute.xlu0 %328
        %v332 = vsel %vm239, %v310, %v315
        %v333 = vsel %vm239, %v311, %v317
        %v334 = vsel %vm242, %v332, %v321
        %v335 = vsel %vm242, %v333, %v323
        %v336 = vsel %vm245, %v334, %v327
        %v337 = vsel %vm245, %v335, %v329
        %s338 = scalar_lea.vmem %s192, 72
        %v339 = vld [vmem:[%s338] sm:$0xff]
        %v340 = vld [vmem:[%s338 + $0x8] sm:$0xff]
        %v341 = vld [vmem:[%s338 + $0x10] sm:$0xf]
        %v344 = vrot.slane %v339, 1
        %v345 = vrot.slane %v340, 1
        %v346 = vsel %vm203, %v344, %v345
        %v348 = vrot.slane %v340, 2
        %v351 = vrot.slane %v340, 3
        %v352 = vrot.slane %v341, 3
        %v353 = vsel %vm211, %v351, %v352
        %v355 = vsel %vm216, %v339, %v346
        %v356 = vsel %vm216, %v348, %v353
        %359 = vrot.lane.b32.xlu0 %v355, 127
        %v360 = vpop.permute.xlu0 %359
        %361 = vrot.lane.b32.xlu0 %v356, 127
        %v362 = vpop.permute.xlu0 %361
        %365 = vrot.lane.b32.xlu0 %v355, 126
        %v366 = vpop.permute.xlu0 %365
        %367 = vrot.lane.b32.xlu0 %v356, 126
        %v368 = vpop.permute.xlu0 %367
        %371 = vrot.lane.b32.xlu0 %v355, 125
        %v372 = vpop.permute.xlu0 %371
        %373 = vrot.lane.b32.xlu0 %v356, 125
        %v374 = vpop.permute.xlu0 %373
        %v377 = vsel %vm239, %v355, %v360
        %v378 = vsel %vm239, %v356, %v362
        %v379 = vsel %vm242, %v377, %v366
        %v380 = vsel %vm242, %v378, %v368
        %v381 = vsel %vm245, %v379, %v372
        %v382 = vsel %vm245, %v380, %v374
        %s383 = sld [smem:[#allocation2]]
        %v384 = vstv %s383
        %v385 = vmul.f32 %v246, %v384
        %v386 = vmul.f32 %v247, %v384
        %s387 = sld [smem:[#allocation2 + $0x1]]
        %v388 = vstv %s387
        %v389 = vmul.f32 %v291, %v388
        %v390 = vmul.f32 %v292, %v388
        %v391 = vadd.f32 %v385, %v389
        %v392 = vadd.f32 %v386, %v390
        %s393 = sld [smem:[#allocation2 + $0x2]]
        %v394 = vstv %s393
        %v395 = vmul.f32 %v336, %v394
        %v396 = vmul.f32 %v337, %v394
        %v397 = vadd.f32 %v391, %v395
        %v398 = vadd.f32 %v392, %v396
        %s399 = sld [smem:[#allocation2 + $0x3]]
        %v400 = vstv %s399
        %v401 = vmul.f32 %v381, %v400
        %v402 = vmul.f32 %v382, %v400
        %v403 = vadd.f32 %v397, %v401
        %v404 = vadd.f32 %v398, %v402
        %s405 = sld [smem:[#allocation4]]
        %v406 = vstv %s405
        %v407 = vadd.f32 %v403, %v406
        %v408 = vadd.f32 %v404, %v406
        %411 = vrot.lane.b32.xlu0 %v407, 1
        %v412 = vpop.permute.xlu0 %411
        %413 = vrot.lane.b32.xlu0 %v408, 1
        %v414 = vpop.permute.xlu0 %413
        %417 = vrot.lane.b32.xlu0 %v407, 2
        %v418 = vpop.permute.xlu0 %417
        %419 = vrot.lane.b32.xlu0 %v408, 2
        %v420 = vpop.permute.xlu0 %419
        %423 = vrot.lane.b32.xlu0 %v407, 3
        %v424 = vpop.permute.xlu0 %423
        %425 = vrot.lane.b32.xlu0 %v408, 3
        %v426 = vpop.permute.xlu0 %425
        %429 = vrot.lane.b32.xlu0 %v407, 4
        %v430 = vpop.permute.xlu0 %429
        %431 = vrot.lane.b32.xlu0 %v408, 4
        %v432 = vpop.permute.xlu0 %431
        %vm435 = vcmask 7168
        %v436 = vsel %vm435, %v407, %v412
        %v437 = vsel %vm435, %v408, %v414
        %vm438 = vcmask 48128
        %v439 = vsel %vm438, %v436, %v418
        %v440 = vsel %vm438, %v437, %v420
        %vm441 = vcmask 89088
        %v442 = vsel %vm441, %v439, %v424
        %v443 = vsel %vm441, %v440, %v426
        %vm444 = vcmask 130048
        %v445 = vsel %vm444, %v442, %v430
        %v446 = vsel %vm444, %v443, %v432
        %vm447 = vcmask 155648
        %448 = vst.msk [vmem:[%s197] sm:$0x1] %vm447, %v445
        %vm449 = vcmask 159744
        %450 = vst.msk [vmem:[%s197 + $0x1] sm:$0x1f] %vm449, %v445
        %vm451 = vcmask 162820
        %452 = vst.msk [vmem:[%s197 + $0x2] sm:$0xf0] %vm451, %v445
        %453 = vst.msk [vmem:[%s197 + $0xa] sm:$0x1] %vm447, %v446
        %454 = vst.msk [vmem:[%s197 + $0xb] sm:$0x1f] %vm449, %v446
        %455 = vst.msk [vmem:[%s197 + $0xc] sm:$0xf0] %vm451, %v446
        %s456 = sld [smem:[#allocation2 + $0x4]]
        %v457 = vstv %s456
        %v458 = vmul.f32 %v246, %v457
        %v459 = vmul.f32 %v247, %v457
        %s460 = sld [smem:[#allocation2 + $0x5]]
        %v461 = vstv %s460
        %v462 = vmul.f32 %v291, %v461
        %v463 = vmul.f32 %v292, %v461
        %v464 = vadd.f32 %v458, %v462
        %v465 = vadd.f32 %v459, %v463
        %s466 = sld [smem:[#allocation2 + $0x6]]
        %v467 = vstv %s466
        %v468 = vmul.f32 %v336, %v467
        %v469 = vmul.f32 %v337, %v467
        %v470 = vadd.f32 %v464, %v468
        %v471 = vadd.f32 %v465, %v469
        %s472 = sld [smem:[#allocation2 + $0x7]]
        %v473 = vstv %s472
        %v474 = vmul.f32 %v381, %v473
        %v475 = vmul.f32 %v382, %v473
        %v476 = vadd.f32 %v470, %v474
        %v477 = vadd.f32 %v471, %v475
        %s478 = sld [smem:[#allocation4 + $0x1]]
        %v479 = vstv %s478
        %v480 = vadd.f32 %v476, %v479
        %v481 = vadd.f32 %v477, %v479
        %484 = vrot.lane.b32.xlu0 %v480, 1
        %v485 = vpop.permute.xlu0 %484
        %486 = vrot.lane.b32.xlu0 %v481, 1
        %v487 = vpop.permute.xlu0 %486
        %490 = vrot.lane.b32.xlu0 %v480, 2
        %v491 = vpop.permute.xlu0 %490
        %492 = vrot.lane.b32.xlu0 %v481, 2
        %v493 = vpop.permute.xlu0 %492
        %496 = vrot.lane.b32.xlu0 %v480, 3
        %v497 = vpop.permute.xlu0 %496
        %498 = vrot.lane.b32.xlu0 %v481, 3
        %v499 = vpop.permute.xlu0 %498
        %502 = vrot.lane.b32.xlu0 %v480, 4
        %v503 = vpop.permute.xlu0 %502
        %504 = vrot.lane.b32.xlu0 %v481, 4
        %v505 = vpop.permute.xlu0 %504
        %v508 = vsel %vm435, %v480, %v485
        %v509 = vsel %vm435, %v481, %v487
        %v510 = vsel %vm438, %v508, %v491
        %v511 = vsel %vm438, %v509, %v493
        %v512 = vsel %vm441, %v510, %v497
        %v513 = vsel %vm441, %v511, %v499
        %v514 = vsel %vm444, %v512, %v503
        %v515 = vsel %vm444, %v513, %v505
        %s516 = scalar_lea.vmem %s197, 24
        %517 = vst.msk [vmem:[%s516] sm:$0x1] %vm447, %v514
        %518 = vst.msk [vmem:[%s516 + $0x1] sm:$0x1f] %vm449, %v514
        %519 = vst.msk [vmem:[%s516 + $0x2] sm:$0xf0] %vm451, %v514
        %520 = vst.msk [vmem:[%s516 + $0xa] sm:$0x1] %vm447, %v515
        %521 = vst.msk [vmem:[%s516 + $0xb] sm:$0x1f] %vm449, %v515
        %522 = vst.msk [vmem:[%s516 + $0xc] sm:$0xf0] %vm451, %v515
        %s523 = sld [smem:[#allocation2 + $0x8]]
        %v524 = vstv %s523
        %v525 = vmul.f32 %v246, %v524
        %v526 = vmul.f32 %v247, %v524
        %s527 = sld [smem:[#allocation2 + $0x9]]
        %v528 = vstv %s527
        %v529 = vmul.f32 %v291, %v528
        %v530 = vmul.f32 %v292, %v528
        %v531 = vadd.f32 %v525, %v529
        %v532 = vadd.f32 %v526, %v530
        %s533 = sld [smem:[#allocation2 + $0xa]]
        %v534 = vstv %s533
        %v535 = vmul.f32 %v336, %v534
        %v536 = vmul.f32 %v337, %v534
        %v537 = vadd.f32 %v531, %v535
        %v538 = vadd.f32 %v532, %v536
        %s539 = sld [smem:[#allocation2 + $0xb]]
        %v540 = vstv %s539
        %v541 = vmul.f32 %v381, %v540
        %v542 = vmul.f32 %v382, %v540
        %v543 = vadd.f32 %v537, %v541
        %v544 = vadd.f32 %v538, %v542
        %s545 = sld [smem:[#allocation4 + $0x2]]
        %v546 = vstv %s545
        %v547 = vadd.f32 %v543, %v546
        %v548 = vadd.f32 %v544, %v546
        %551 = vrot.lane.b32.xlu0 %v547, 1
        %v552 = vpop.permute.xlu0 %551
        %553 = vrot.lane.b32.xlu0 %v548, 1
        %v554 = vpop.permute.xlu0 %553
        %557 = vrot.lane.b32.xlu0 %v547, 2
        %v558 = vpop.permute.xlu0 %557
        %559 = vrot.lane.b32.xlu0 %v548, 2
        %v560 = vpop.permute.xlu0 %559
        %563 = vrot.lane.b32.xlu0 %v547, 3
        %v564 = vpop.permute.xlu0 %563
        %565 = vrot.lane.b32.xlu0 %v548, 3
        %v566 = vpop.permute.xlu0 %565
        %569 = vrot.lane.b32.xlu0 %v547, 4
        %v570 = vpop.permute.xlu0 %569
        %571 = vrot.lane.b32.xlu0 %v548, 4
        %v572 = vpop.permute.xlu0 %571
        %v575 = vsel %vm435, %v547, %v552
        %v576 = vsel %vm435, %v548, %v554
        %v577 = vsel %vm438, %v575, %v558
        %v578 = vsel %vm438, %v576, %v560
        %v579 = vsel %vm441, %v577, %v564
        %v580 = vsel %vm441, %v578, %v566
        %v581 = vsel %vm444, %v579, %v570
        %v582 = vsel %vm444, %v580, %v572
        %s583 = scalar_lea.vmem %s197, 48
        %584 = vst.msk [vmem:[%s583] sm:$0x1] %vm447, %v581
        %585 = vst.msk [vmem:[%s583 + $0x1] sm:$0x1f] %vm449, %v581
        %586 = vst.msk [vmem:[%s583 + $0x2] sm:$0xf0] %vm451, %v581
        %587 = vst.msk [vmem:[%s583 + $0xa] sm:$0x1] %vm447, %v582
        %588 = vst.msk [vmem:[%s583 + $0xb] sm:$0x1f] %vm449, %v582
        %589 = vst.msk [vmem:[%s583 + $0xc] sm:$0xf0] %vm451, %v582
        %s590 = sld [smem:[#allocation2 + $0xc]]
        %v591 = vstv %s590
        %v592 = vmul.f32 %v246, %v591
        %v593 = vmul.f32 %v247, %v591
        %s594 = sld [smem:[#allocation2 + $0xd]]
        %v595 = vstv %s594
        %v596 = vmul.f32 %v291, %v595
        %v597 = vmul.f32 %v292, %v595
        %v598 = vadd.f32 %v592, %v596
        %v599 = vadd.f32 %v593, %v597
        %s600 = sld [smem:[#allocation2 + $0xe]]
        %v601 = vstv %s600
        %v602 = vmul.f32 %v336, %v601
        %v603 = vmul.f32 %v337, %v601
        %v604 = vadd.f32 %v598, %v602
        %v605 = vadd.f32 %v599, %v603
        %s606 = sld [smem:[#allocation2 + $0xf]]
        %v607 = vstv %s606
        %v608 = vmul.f32 %v381, %v607
        %v609 = vmul.f32 %v382, %v607
        %v610 = vadd.f32 %v604, %v608
        %v611 = vadd.f32 %v605, %v609
        %s612 = sld [smem:[#allocation4 + $0x3]]
        %v613 = vstv %s612
        %v614 = vadd.f32 %v610, %v613
        %v615 = vadd.f32 %v611, %v613
        %618 = vrot.lane.b32.xlu0 %v614, 1
        %v619 = vpop.permute.xlu0 %618
        %620 = vrot.lane.b32.xlu0 %v615, 1
        %v621 = vpop.permute.xlu0 %620
        %624 = vrot.lane.b32.xlu0 %v614, 2
        %v625 = vpop.permute.xlu0 %624
        %626 = vrot.lane.b32.xlu0 %v615, 2
        %v627 = vpop.permute.xlu0 %626
        %630 = vrot.lane.b32.xlu0 %v614, 3
        %v631 = vpop.permute.xlu0 %630
        %632 = vrot.lane.b32.xlu0 %v615, 3
        %v633 = vpop.permute.xlu0 %632
        %636 = vrot.lane.b32.xlu0 %v614, 4
        %v637 = vpop.permute.xlu0 %636
        %638 = vrot.lane.b32.xlu0 %v615, 4
        %v639 = vpop.permute.xlu0 %638
        %v642 = vsel %vm435, %v614, %v619
        %v643 = vsel %vm435, %v615, %v621
        %v644 = vsel %vm438, %v642, %v625
        %v645 = vsel %vm438, %v643, %v627
        %v646 = vsel %vm441, %v644, %v631
        %v647 = vsel %vm441, %v645, %v633
        %v648 = vsel %vm444, %v646, %v637
        %v649 = vsel %vm444, %v647, %v639
        %s650 = scalar_lea.vmem %s197, 72
        %651 = vst.msk [vmem:[%s650] sm:$0x1] %vm447, %v648
        %652 = vst.msk [vmem:[%s650 + $0x1] sm:$0x1f] %vm449, %v648
        %653 = vst.msk [vmem:[%s650 + $0x2] sm:$0xf0] %vm451, %v648
        %654 = vst.msk [vmem:[%s650 + $0xa] sm:$0x1] %vm447, %v649
        %655 = vst.msk [vmem:[%s650 + $0xb] sm:$0x1f] %vm449, %v649
        %656 = vst.msk [vmem:[%s650 + $0xc] sm:$0xf0] %vm451, %v649
        %p657 = scmp.lt.s32.totalorder %s16, 1
        %s658 = scalar_select %p657, %s16, 1
        %s659 = smul.addr %s658, 12
        %s660 = smul.addr %s659, 8
        %s661 = scalar_lea.vmem %s3, %s660
        // Predicated region
        $region41: #{tpu_custom_call.1} parent=31 // pred_check
          %p662 = pneg %p102
        $region42: #{tpu_custom_call.1} parent=31 // pred_check_branch
          %664 = sbr.rel (%p662) target = $region44
        $region43: #{tpu_custom_call.1} parent=31 // pred_region
          _
        $region44: #{tpu_custom_call.1} parent=31 // pred_fallthru
          _
      $region32: #{tpu_custom_call.1} parent=5 // pred_fallthru
        _
      %p665 = scmp.le.s32.totalorder 2, %s11
      // Predicated region
      $region45: #{tpu_custom_call.1} parent=5 // pred_check
        %p666 = pneg %p665
      $region46: #{tpu_custom_call.1} parent=5 // pred_check_branch
        %668 = sbr.rel (%p666) target = $region48
      $region47: #{tpu_custom_call.1} parent=5 // pred_region
        %s669 = ssub.s32 %s11, 2
        // Predicated region
        $region49: #{tpu_custom_call.1} parent=47 // pred_check
          %p670 = pneg %p108
        $region50: #{tpu_custom_call.1} parent=47 // pred_check_branch
          %672 = sbr.rel (%p670) target = $region52
        $region51: #{tpu_custom_call.1} parent=47 // pred_region
          %p673 = scmp.lt.s32.totalorder %s17, 1
          %s674 = scalar_select %p673, %s17, 1
          %s675 = smul.addr %s674, 12
          %s676 = smul.addr %s675, 8
          %s677 = scalar_lea.vmem %s3, %s676
        $region52: #{tpu_custom_call.1} parent=47 // pred_fallthru
          _
      $region48: #{tpu_custom_call.1} parent=5 // pred_fallthru
        _
    $region6: #{tpu_custom_call.1} parent=1 // loop_footer
      %s15 = sadd.s32 1, %s11
    $region7: #{tpu_custom_call.1} parent=1 // loop_footer_branch
      %10 = sbr.rel target = $region3
    $region8: #{tpu_custom_call.1} parent=1 // loop_exit
      _
    %678 = vsyncpa [#allocation3], 1
    %s679 = scalar_lea.sflag [#allocation3], 1
    %680 = vsyncpa %s679, 1
    %681 = vsyncpa [#allocation5], 1

</llo_original>
